<compile_context>
chip_gen: v7x
topology: tpu7x:2x2x1
jax: 0.10.0
libtpu: 0.0.40
codegen_flags: <defaults>
</compile_context>

<pallas_src>
import jax
import jax.numpy as jnp
from jax import lax
from jax.experimental import pallas as pl
from jax.experimental.pallas import tpu as pltpu


def _self_attention_kernel(h_ref, a_ref, b_ref, bias_ref, o_ref):
    # h_ref:    (Bt, L, D)   batch tile of sequence features
    # a_ref:    (D, da)      first projection (resident across grid steps)
    # b_ref:    (1, da)      second projection as a row vector, f32
    # bias_ref: (Bt, L)      additive mask bias (0 or -1e30*batch_mask), f32
    # o_ref:    (Bt, D)      attention-pooled output
    Bt, L, D = h_ref.shape
    da = a_ref.shape[-1]

    h = h_ref[...]                                   # (Bt, L, D)
    a = a_ref[...]                                   # (D, da)
    b = b_ref[...]                                   # (1, da) f32

    # ---- logits: tanh(h @ a) . b --------------------------------------
    # MXU matmul with f32 accumulation; leading dims merged -> plain 2-D dot.
    ha = jnp.dot(h.reshape(Bt * L, D), a,
                 preferred_element_type=jnp.float32)            # (Bt*L, da) f32
    t = jnp.tanh(ha).reshape(Bt, L, da)                         # f32 elementwise
    # Skinny (da -> 1) contraction as VPU multiply + lane reduce, landing
    # directly in the lane-dense (Bt, L) logits layout.
    e = jnp.sum(t * b, axis=-1) + bias_ref[...]                 # (Bt, L) f32

    # ---- softmax over the sequence (lane) axis -------------------------
    e_max = jnp.max(e, axis=-1, keepdims=True)                  # (Bt, 1)
    p = jnp.exp(e - e_max)                                      # (Bt, L)
    denom = jnp.sum(p, axis=-1, keepdims=True)                  # (Bt, 1)
    attn = p * pl.reciprocal(denom, approx=True)                # (Bt, L)

    # ---- attention-weighted sum over the sequence ----------------------
    # out[b, d] = sum_l attn[b, l] * h[b, l, d]; done on the VPU (lane
    # broadcast + sublane reduce) instead of an M=1 MXU matmul.
    attn_b = lax.broadcast_in_dim(attn, (Bt, L, D), (0, 1))     # (Bt, L, D) f32
    out = jnp.sum(attn_b * h, axis=1)                           # (Bt, D) f32
    o_ref[...] = out.astype(o_ref.dtype)


def self_attention_seq(h, a, b, mask=None, *, block_b=8,
                       vmem_limit_bytes=48 * 1024 * 1024):
    """Pallas implementation of SelfAttentionSeq.forward (return_logits=False).

    h:    (B, L, dim), f32 or bf16 (f32 accumulation is used in-kernel)
    a:    (dim, da)
    b:    (da, 1)
    mask: optional (B, L) bool, True = padding token
    block_b should be a multiple of 8 (sublane count).
    """
    B, L, D = h.shape
    da = a.shape[-1]

    # Precompute the additive mask bias (matches the PyTorch semantics):
    #   full_mask  = -1e30 * mask
    #   batch_mask = bool(any unmasked token in the row)  (per batch row!)
    #   bias       = full_mask * batch_mask
    if mask is None:
        bias = jnp.zeros((B, L), jnp.float32)
    else:
        mask_f = mask.astype(jnp.float32).reshape(B, L)
        batch_mask = (jnp.sum(1.0 - mask_f, axis=-1) > 0.0).astype(jnp.float32)
        bias = (-1e30 * mask_f) * batch_mask[:, None]

    b_row = b.reshape(1, da).astype(jnp.float32)

    # Pad the batch up to a multiple of the batch block so the last tile holds
    # no garbage (zero rows softmax to a harmless uniform distribution).
    Bt = int(block_b)
    Bp = pl.cdiv(B, Bt) * Bt
    if Bp != B:
        h = jnp.pad(h, ((0, Bp - B), (0, 0), (0, 0)))
        bias = jnp.pad(bias, ((0, Bp - B), (0, 0)))

    out = pl.pallas_call(
        _self_attention_kernel,
        out_shape=jax.ShapeDtypeStruct((Bp, D), h.dtype),
        grid_spec=pl.GridSpec(
            grid=(Bp // Bt,),
            in_specs=[
                pl.BlockSpec((Bt, L, D), lambda i: (i, 0, 0)),   # h tile
                pl.BlockSpec((D, da), lambda i: (0, 0)),         # a (resident)
                pl.BlockSpec((1, da), lambda i: (0, 0)),         # b row (resident)
                pl.BlockSpec((Bt, L), lambda i: (i, 0)),         # mask-bias tile
            ],
            out_specs=pl.BlockSpec((Bt, D), lambda i: (i, 0)),
        ),
        compiler_params=pltpu.CompilerParams(
            dimension_semantics=("parallel",),
            vmem_limit_bytes=vmem_limit_bytes,
        ),
    )(h, a, b_row, bias)
    return out[:B]


def _reference(h, a, b, mask=None):
    """Pure-JAX transcription of the PyTorch forward, for verification."""
    e = jnp.matmul(jnp.tanh(jnp.matmul(h, a)), b)                      # (B, L, 1)
    if mask is not None:
        full_mask = -1e30 * mask.astype(jnp.float32)                   # (B, L)
        batch_mask = (jnp.sum(~mask, -1) > 0).astype(jnp.float32)[..., None]
        m = full_mask * batch_mask                                     # (B, L)
        e = e + m[..., None]
    attention = jax.nn.softmax(e, axis=1)                              # (B, L, 1)
    out = jnp.matmul(jnp.swapaxes(attention, 1, 2), h)                 # (B, 1, D)
    return jnp.squeeze(out, axis=1)                                    # (B, D)


if __name__ == "__main__":
    B, L, DIM, DA = 2, 8, 32, 16

    key = jax.random.PRNGKey(0)
    k_h, k_a, k_b = jax.random.split(key, 3)

    h = jax.random.normal(k_h, (B, L, DIM), dtype=jnp.float32)

    # Deterministic xavier_uniform_ with gain=1.414 (same shapes as nn.Parameter).
    gain = 1.414
    bound_a = gain * (6.0 / (DIM + DA)) ** 0.5
    bound_b = gain * (6.0 / (DA + 1)) ** 0.5
    a = jax.random.uniform(k_a, (DIM, DA), jnp.float32, -bound_a, bound_a)
    b = jax.random.uniform(k_b, (DA, 1), jnp.float32, -bound_b, bound_b)

    # Mask: True = padding. Batch 0 has no padding; batch 1 has last 3 tokens padded.
    mask = jnp.array(
        [[False] * L,
         [False] * (L - 3) + [True] * 3],
        dtype=jnp.bool_,
    )

    # f32 path (approx reciprocal => slightly looser tolerance than 1e-5).
    out = jax.block_until_ready(self_attention_seq(h, a, b, mask))
    ref = _reference(h, a, b, mask)
    assert out.shape == (B, DIM)
    assert jnp.allclose(out, ref, atol=5e-3, rtol=5e-3), "mismatch vs reference"

    # mask=None path.
    out_nm = jax.block_until_ready(self_attention_seq(h, a, b, None))
    ref_nm = _reference(h, a, b, None)
    assert jnp.allclose(out_nm, ref_nm, atol=5e-3, rtol=5e-3), "mismatch (no mask)"

    # bf16 activations/weights (HBM-roofline win); f32 accumulation in-kernel.
    h16, a16 = h.astype(jnp.bfloat16), a.astype(jnp.bfloat16)
    out16 = jax.block_until_ready(self_attention_seq(h16, a16, b, mask))
    ref16 = _reference(h16.astype(jnp.float32), a16.astype(jnp.float32), b, mask)
    assert jnp.allclose(out16.astype(jnp.float32), ref16, atol=3e-2, rtol=3e-2), \
        "mismatch vs reference (bf16)"

    print("KERNEL_OK")
</pallas_src>

<mosaic_0001>
module attributes {stable_mosaic.version = 11 : i64} {
  func.func @_self_attention_kernel(%arg0: i32, %arg1: memref<8x8x32xf32, #tpu.memory_space<vmem>>, %arg2: memref<32x16xf32, #tpu.memory_space<vmem>>, %arg3: memref<1x16xf32, #tpu.memory_space<vmem>>, %arg4: memref<8x8xf32, #tpu.memory_space<vmem>>, %arg5: memref<8x32xf32, #tpu.memory_space<vmem>>) attributes {dimension_semantics = [#tpu.dimension_semantics<parallel>], iteration_bounds = array<i64: 1>, scalar_prefetch = 0 : i64, scratch_operands = 0 : i64, tpu.core_type = #tpu.core_type<tc>, window_params = [{transform_indices = @transform_0, window_bounds = array<i64: 8, 8, 32>}, {pipeline_mode = #tpu.pipeline_mode<synchronous>, transform_indices = @transform_1, window_bounds = array<i64: 32, 16>}, {pipeline_mode = #tpu.pipeline_mode<synchronous>, transform_indices = @transform_2, window_bounds = array<i64: 1, 16>}, {transform_indices = @transform_3, window_bounds = array<i64: 8, 8>}, {transform_indices = @transform_4, window_bounds = array<i64: 8, 32>}]} {
    %c0 = arith.constant 0 : index
    %c0_0 = arith.constant 0 : index
    %c0_1 = arith.constant 0 : index
    %0 = vector.load %arg1[%c0, %c0_0, %c0_1] : memref<8x8x32xf32, #tpu.memory_space<vmem>>, vector<8x8x32xf32>
    %c0_2 = arith.constant 0 : index
    %c0_3 = arith.constant 0 : index
    %1 = vector.load %arg2[%c0_2, %c0_3] : memref<32x16xf32, #tpu.memory_space<vmem>>, vector<32x16xf32>
    %c0_4 = arith.constant 0 : index
    %c0_5 = arith.constant 0 : index
    %2 = vector.load %arg3[%c0_4, %c0_5] : memref<1x16xf32, #tpu.memory_space<vmem>>, vector<1x16xf32>
    %3 = vector.shape_cast %0 : vector<8x8x32xf32> to vector<64x32xf32>
    %cst = arith.constant dense<0.000000e+00> : vector<64x16xf32>
    %4 = tpu.matmul %3, %1, %cst {dimension_numbers = #tpu.dot_dimension_numbers<[1], [0], [0], [1], [0, 0, 1, 1], [], []>} : vector<64x32xf32>, vector<32x16xf32>, vector<64x16xf32> -> vector<64x16xf32>
    %5 = math.tanh %4 : vector<64x16xf32>
    %6 = vector.shape_cast %5 : vector<64x16xf32> to vector<8x8x16xf32>
    %7 = vector.shape_cast %2 : vector<1x16xf32> to vector<1x1x16xf32>
    %8 = vector.broadcast %7 : vector<1x1x16xf32> to vector<8x8x16xf32>
    %9 = arith.mulf %6, %8 : vector<8x8x16xf32>
    %cst_6 = arith.constant dense<0.000000e+00> : vector<8x8xf32>
    %10 = vector.multi_reduction <add>, %9, %cst_6 [2] : vector<8x8x16xf32> to vector<8x8xf32>
    %c0_7 = arith.constant 0 : index
    %c0_8 = arith.constant 0 : index
    %11 = vector.load %arg4[%c0_7, %c0_8] : memref<8x8xf32, #tpu.memory_space<vmem>>, vector<8x8xf32>
    %12 = arith.addf %10, %11 : vector<8x8xf32>
    %cst_9 = arith.constant dense<0xFF800000> : vector<8xf32>
    %13 = vector.multi_reduction <maximumf>, %12, %cst_9 [1] : vector<8x8xf32> to vector<8xf32>
    %14 = vector.shape_cast %13 : vector<8xf32> to vector<8x1xf32>
    %15 = vector.broadcast %14 : vector<8x1xf32> to vector<8x8xf32>
    %16 = arith.subf %12, %15 : vector<8x8xf32>
    %17 = math.exp %16 : vector<8x8xf32>
    %cst_10 = arith.constant dense<0.000000e+00> : vector<8xf32>
    %18 = vector.multi_reduction <add>, %17, %cst_10 [1] : vector<8x8xf32> to vector<8xf32>
    %19 = vector.shape_cast %18 : vector<8xf32> to vector<8x1xf32>
    %20 = tpu.reciprocal %19 {approx = true} : vector<8x1xf32> -> vector<8x1xf32>
    %21 = vector.broadcast %20 : vector<8x1xf32> to vector<8x8xf32>
    %22 = arith.mulf %17, %21 : vector<8x8xf32>
    %23 = vector.shape_cast %22 : vector<8x8xf32> to vector<8x8x1xf32>
    %24 = vector.broadcast %23 : vector<8x8x1xf32> to vector<8x8x32xf32>
    %25 = arith.mulf %24, %0 : vector<8x8x32xf32>
    %cst_11 = arith.constant dense<0.000000e+00> : vector<8x32xf32>
    %26 = vector.multi_reduction <add>, %25, %cst_11 [1] : vector<8x8x32xf32> to vector<8x32xf32>
    %c0_12 = arith.constant 0 : index
    %c0_13 = arith.constant 0 : index
    %27 = vector.load %arg5[%c0_12, %c0_13] : memref<8x32xf32, #tpu.memory_space<vmem>>, vector<8x32xf32>
    tpu.vector_store %arg5[%c0_12, %c0_13], %26 {strides = array<i32>} : memref<8x32xf32, #tpu.memory_space<vmem>>, vector<8x32xf32>,
    return
  }
  func.func @transform_0(%arg0: i32) -> (i32, i32, i32) {
    %c0_i32 = arith.constant 0 : i32
    %c0_i32_0 = arith.constant 0 : i32
    %c0_i32_1 = arith.constant 0 : i32
    return %arg0, %c0_i32, %c0_i32_0 : i32, i32, i32
  }
  func.func @transform_1(%arg0: i32) -> (i32, i32) {
    %c0_i32 = arith.constant 0 : i32
    %c0_i32_0 = arith.constant 0 : i32
    %c0_i32_1 = arith.constant 0 : i32
    return %c0_i32, %c0_i32_0 : i32, i32
  }
  func.func @transform_2(%arg0: i32) -> (i32, i32) {
    %c0_i32 = arith.constant 0 : i32
    %c0_i32_0 = arith.constant 0 : i32
    %c0_i32_1 = arith.constant 0 : i32
    return %c0_i32, %c0_i32_0 : i32, i32
  }
  func.func @transform_3(%arg0: i32) -> (i32, i32) {
    %c0_i32 = arith.constant 0 : i32
    %c0_i32_0 = arith.constant 0 : i32
    return %arg0, %c0_i32 : i32, i32
  }
  func.func @transform_4(%arg0: i32) -> (i32, i32) {
    %c0_i32 = arith.constant 0 : i32
    %c0_i32_0 = arith.constant 0 : i32
    return %arg0, %c0_i32 : i32, i32
  }
}

</mosaic_0001>

<llo_original>
// kernel: tpu_custom_call.1
$region0: #{tpu_custom_call.1}
  #allocation0 [shape = 'u32[]', space=smem, size = 0x4, offset = 0x4, fixed_abs, tag = 'smem constant byte address 0x4 - core index']
  #allocation1 [shape = 'u32[144,128]{1,0:T(1,128)}', space=vmem, size = 0x12000, scoped, tag = 'internal scratch']
  %s0 = inlined_call_operand.hbm [shape: f32[8,8,32], index: 0, kind: input, shape index: {}]
  %s1 = inlined_call_operand.vmem [shape: f32[32,16], index: 1, kind: input, shape index: {}]
  %s2 = inlined_call_operand.vmem [shape: f32[1,16], index: 2, kind: input, shape index: {}]
  %s3 = inlined_call_operand.vmem [shape: f32[8,8], index: 3, kind: input, shape index: {}]
  %s4 = inlined_call_operand.hbm [shape: f32[8,32], index: 4, kind: output, shape index: {}]
  %s5 = sld [smem:[#allocation0]]
  $region30: #{tpu_custom_call.1} parent=0
    _
  %s7 = ssub.s32 1, %s5
  %s8 = scalar_select 0, %s7, %s5
  $region1: #{tpu_custom_call.1} parent=0
    #allocation2 [shape = 'u8[32768]{0}', space=vmem, size = 0x8000, scoped, tag = 'input window, operand 0, single buffered']
    #allocation3 [shape = 's32[1]{0}', space=sflag, size = 0x4, scoped, tag = 'scoped memory for tpu_custom_call.1']
    #allocation4 [shape = 's32[1]{0}', space=sflag, size = 0x4, scoped, tag = 'scoped memory for tpu_custom_call.1']
    #allocation5 [shape = 'u8[4096]{0}', space=vmem, size = 0x1000, scoped, tag = 'output window, operand 0, single buffered']
    %9 = vsyncpa [#allocation3], 0
    %10 = vsyncpa [#allocation4], 0
    // Predicated region
    $region2: #{tpu_custom_call.1} parent=1 // pred_check
      _
    $region3: #{tpu_custom_call.1} parent=1 // pred_check_branch
      %12 = sbr.rel (0) target = $region5
    $region4: #{tpu_custom_call.1} parent=1 // pred_region
      %s14 = ssub.s32 1024, 1024
      %15 = vsyncadd [#allocation3], %s14
      %s16 = sshll.u32 [#allocation2], 4
      %s17 = int_to_ptr.vmem [resolvable:$true] %s16
      %22 = dma.hbm_to_vmem [thread:$0]  %s0, 1024, %s17, [#allocation3], 128, 128, 8
    $region5: #{tpu_custom_call.1} parent=1 // pred_fallthru
      _
    // Predicated region
    $region6: #{tpu_custom_call.1} parent=1 // pred_check
      _
    $region7: #{tpu_custom_call.1} parent=1 // pred_check_branch
      %24 = sbr.rel (0) target = $region9
    $region8: #{tpu_custom_call.1} parent=1 // pred_region
      _
    $region9: #{tpu_custom_call.1} parent=1 // pred_fallthru
      _
    // Predicated region
    $region10: #{tpu_custom_call.1} parent=1 // pred_check
      _
    $region11: #{tpu_custom_call.1} parent=1 // pred_check_branch
      %26 = sbr.rel (0) target = $region13
    $region12: #{tpu_custom_call.1} parent=1 // pred_region
      _
    $region13: #{tpu_custom_call.1} parent=1 // pred_fallthru
      _
    // Predicated region
    $region14: #{tpu_custom_call.1} parent=1 // pred_check
      _
    $region15: #{tpu_custom_call.1} parent=1 // pred_check_branch
      %28 = sbr.rel (0) target = $region17
    $region16: #{tpu_custom_call.1} parent=1 // pred_region
      _
    $region17: #{tpu_custom_call.1} parent=1 // pred_fallthru
      _
    // Predicated region
    $region18: #{tpu_custom_call.1} parent=1 // pred_check
      _
    $region19: #{tpu_custom_call.1} parent=1 // pred_check_branch
      %30 = sbr.rel (0) target = $region21
    $region20: #{tpu_custom_call.1} parent=1 // pred_region
      %31 = dma.done [#allocation3], 1024
    $region21: #{tpu_custom_call.1} parent=1 // pred_fallthru
      _
    %v32 = vld [vmem:[#allocation2] sm:$0xff]
    %v33 = vld [vmem:[#allocation2 + $0x8] sm:$0xff]
    %v34 = vld [vmem:[#allocation2 + $0x10] sm:$0xff]
    %v35 = vld [vmem:[#allocation2 + $0x18] sm:$0xff]
    %v36 = vld [vmem:[#allocation2 + $0x20] sm:$0xff]
    %v37 = vld [vmem:[#allocation2 + $0x28] sm:$0xff]
    %v38 = vld [vmem:[#allocation2 + $0x30] sm:$0xff]
    %v39 = vld [vmem:[#allocation2 + $0x38] sm:$0xff]
    %v40 = vld [vmem:[%s1] sm:$0xff]
    %v41 = vld [vmem:[%s1 + $0x8] sm:$0xff]
    %v42 = vld [vmem:[%s1 + $0x10] sm:$0xff]
    %v43 = vld [vmem:[%s1 + $0x18] sm:$0xff]
    %v44 = vld [vmem:[%s2] sm:$0x1]
    %vm45 = vcmask 261120
    %v47 = vsel %vm45, %v32, 0
    %v50 = vsel %vm45, %v33, 0
    %v53 = vsel %vm45, %v34, 0
    %v56 = vsel %vm45, %v35, 0
    %v59 = vsel %vm45, %v36, 0
    %v62 = vsel %vm45, %v37, 0
    %v65 = vsel %vm45, %v38, 0
    %v68 = vsel %vm45, %v39, 0
    %70 = vmatprep.subr.mxu0 0.0
    %71 = vmatpush1.msra.mxu0 %v40
    %72 = vmatprep.subr.mxu0 0.0
    %73 = vmatpush1.msra.mxu0 %v41
    %74 = vmatprep.subr.mxu0 0.0
    %75 = vmatpush1.msra.mxu0 %v42
    %76 = vmatprep.subr.mxu0 0.0
    %77 = vmatpush1.msra.mxu0 %v43
    %78 = vmatprep.subr.mxu0 0.0
    %79 = vmatpush1.msra.mxu0 0.0
    %80 = vmatprep.subr.mxu0 0.0
    %81 = vmatpush1.msra.mxu0 0.0
    %82 = vmatprep.subr.mxu0 0.0
    %83 = vmatpush1.msra.mxu0 0.0
    %84 = vmatprep.subr.mxu0 0.0
    %85 = vmatpush1.msra.mxu0 0.0
    %86 = vmatprep.subr.mxu0 0.0
    %87 = vmatpush1.msra.mxu0 0.0
    %88 = vmatprep.subr.mxu0 0.0
    %89 = vmatpush1.msra.mxu0 0.0
    %90 = vmatprep.subr.mxu0 0.0
    %91 = vmatpush1.msra.mxu0 0.0
    %92 = vmatprep.subr.mxu0 0.0
    %93 = vmatpush1.msra.mxu0 0.0
    %94 = vmatprep.subr.mxu0 0.0
    %95 = vmatpush1.msra.mxu0 0.0
    %96 = vmatprep.subr.mxu0 0.0
    %97 = vmatpush1.msra.mxu0 0.0
    %98 = vmatprep.subr.mxu0 0.0
    %99 = vmatpush1.msra.mxu0 0.0
    %100 = vmatprep.subr.mxu0 0.0
    %101 = vmatpush1.msra.mxu0 0.0
    %102 = vmatprep.subr.mxu0 0.0
    %103 = vmatpush1.msra.mxu0 0.0
    %104 = vmatprep.subr.mxu0 0.0
    %105 = vmatpush1.msra.mxu0 0.0
    %106 = vmatprep.subr.mxu0 0.0
    %107 = vmatpush1.msra.mxu0 0.0
    %108 = vmatprep.subr.mxu0 0.0
    %109 = vmatpush1.msra.mxu0 0.0
    %110 = vmatprep.subr.mxu0 0.0
    %111 = vmatpush1.msra.mxu0 0.0
    %112 = vmatprep.subr.mxu0 0.0
    %113 = vmatpush1.msra.mxu0 0.0
    %114 = vmatprep.subr.mxu0 0.0
    %115 = vmatpush1.msra.mxu0 0.0
    %116 = vmatprep.subr.mxu0 0.0
    %117 = vmatpush1.msra.mxu0 0.0
    %118 = vmatprep.subr.mxu0 0.0
    %119 = vmatpush1.msra.mxu0 0.0
    %120 = vmatprep.subr.mxu0 0.0
    %121 = vmatpush1.msra.mxu0 0.0
    %122 = vmatprep.subr.mxu0 0.0
    %123 = vmatpush1.msra.mxu0 0.0
    %124 = vmatprep.subr.mxu0 0.0
    %125 = vmatpush1.msra.mxu0 0.0
    %126 = vmatprep.subr.mxu0 0.0
    %127 = vmatpush1.msra.mxu0 0.0
    %128 = vmatprep.subr.mxu0 0.0
    %129 = vmatpush1.msra.mxu0 0.0
    %130 = vmatprep.subr.mxu0 0.0
    %131 = vmatpush1.msra.mxu0 0.0
    %132 = vmatprep.subr.mxu0 0.0
    %133 = vmatpush1.msra.mxu0 0.0
    %134 = vmatprep.mubr.f32.mxu0 0.0
    %135 = vmatmul.mubr.f32.gmra.mrb[0].mxu0 %v47
    %v136 = vpop.f32.mrb[0].mxu0
    %v137 = vadd.f32 0.0, %v136
    %v138 = vpop.f32.mrb[0].mxu0
    %139 = vmatprep.mubr.f32.mxu0 0.0
    %140 = vmatmul.mubr.f32.gmra.mrb[0].mxu0 %v50
    %v141 = vpop.f32.mrb[0].mxu0
    %v142 = vadd.f32 0.0, %v141
    %v143 = vpop.f32.mrb[0].mxu0
    %144 = vmatprep.mubr.f32.mxu0 0.0
    %145 = vmatmul.mubr.f32.gmra.mrb[0].mxu0 %v53
    %v146 = vpop.f32.mrb[0].mxu0
    %v147 = vadd.f32 0.0, %v146
    %v148 = vpop.f32.mrb[0].mxu0
    %149 = vmatprep.mubr.f32.mxu0 0.0
    %150 = vmatmul.mubr.f32.gmra.mrb[0].mxu0 %v56
    %v151 = vpop.f32.mrb[0].mxu0
    %v152 = vadd.f32 0.0, %v151
    %v153 = vpop.f32.mrb[0].mxu0
    %154 = vmatprep.mubr.f32.mxu0 0.0
    %155 = vmatmul.mubr.f32.gmra.mrb[0].mxu0 %v59
    %v156 = vpop.f32.mrb[0].mxu0
    %v157 = vadd.f32 0.0, %v156
    %v158 = vpop.f32.mrb[0].mxu0
    %159 = vmatprep.mubr.f32.mxu0 0.0
    %160 = vmatmul.mubr.f32.gmra.mrb[0].mxu0 %v62
    %v161 = vpop.f32.mrb[0].mxu0
    %v162 = vadd.f32 0.0, %v161
    %v163 = vpop.f32.mrb[0].mxu0
    %164 = vmatprep.mubr.f32.mxu0 0.0
    %165 = vmatmul.mubr.f32.gmra.mrb[0].mxu0 %v65
    %v166 = vpop.f32.mrb[0].mxu0
    %v167 = vadd.f32 0.0, %v166
    %v168 = vpop.f32.mrb[0].mxu0
    %169 = vmatprep.mubr.f32.mxu0 0.0
    %170 = vmatmul.mubr.f32.gmra.mrb[0].mxu0 %v68
    %v171 = vpop.f32.mrb[0].mxu0
    %v172 = vadd.f32 0.0, %v171
    %v173 = vpop.f32.mrb[0].mxu0
    %174 = vdwg.mxu0
    %v175 = vtanh.pop %v137
    %v176 = vtanh.pop %v142
    %v177 = vtanh.pop %v147
    %v178 = vtanh.pop %v152
    %v179 = vtanh.pop %v157
    %v180 = vtanh.pop %v162
    %v181 = vtanh.pop %v167
    %v182 = vtanh.pop %v172
    %v184 = vlaneseq
    %v185 = vshrl.u32 %v184, 7
    %v186 = vsub.s32 0, %v185
    %v187 = vrot.slane %v44, %v186
    %v189 = vmul.f32 %v175, %v187
    %v190 = vmul.f32 %v176, %v187
    %v191 = vmul.f32 %v177, %v187
    %v192 = vmul.f32 %v178, %v187
    %v193 = vmul.f32 %v179, %v187
    %v194 = vmul.f32 %v180, %v187
    %v195 = vmul.f32 %v181, %v187
    %v196 = vmul.f32 %v182, %v187
    %vm197 = vcmask 130048
    %v198 = vsel %vm197, %v189, 0.0
    %199 = vadd.xlane.f32.xlu0 %v198
    %v200 = vpop.xlane.xlu0 %199
    %v201 = vsel %vm197, %v190, 0.0
    %202 = vadd.xlane.f32.xlu0 %v201
    %v203 = vpop.xlane.xlu0 %202
    %v204 = vsel %vm197, %v191, 0.0
    %205 = vadd.xlane.f32.xlu0 %v204
    %v206 = vpop.xlane.xlu0 %205
    %v207 = vsel %vm197, %v192, 0.0
    %208 = vadd.xlane.f32.xlu0 %v207
    %v209 = vpop.xlane.xlu0 %208
    %v210 = vsel %vm197, %v193, 0.0
    %211 = vadd.xlane.f32.xlu0 %v210
    %v212 = vpop.xlane.xlu0 %211
    %v213 = vsel %vm197, %v194, 0.0
    %214 = vadd.xlane.f32.xlu0 %v213
    %v215 = vpop.xlane.xlu0 %214
    %v216 = vsel %vm197, %v195, 0.0
    %217 = vadd.xlane.f32.xlu0 %v216
    %v218 = vpop.xlane.xlu0 %217
    %v219 = vsel %vm197, %v196, 0.0
    %220 = vadd.xlane.f32.xlu0 %v219
    %v221 = vpop.xlane.xlu0 %220
    %v222 = vld [vmem:[%s3] sm:$0xff]
    %v224 = vlaneseq
    %v225 = vshrl.u32 %v224, 7
    %v226 = vsub.s32 0, %v225
    %v227 = vrot.slane %v222, %v226
    %229 = vbcast.lane.b32.xlu0 %v227, 256
    %v230 = vpop.permute.xlu0 %229
    %v231 = vlaneseq
    %v232 = vshrl.u32 %v231, 7
    %v233 = vsub.s32 1, %v232
    %v234 = vrot.slane %v222, %v233
    %236 = vbcast.lane.b32.xlu0 %v234, 256
    %v237 = vpop.permute.xlu0 %236
    %v238 = vlaneseq
    %v239 = vshrl.u32 %v238, 7
    %v240 = vsub.s32 2, %v239
    %v241 = vrot.slane %v222, %v240
    %243 = vbcast.lane.b32.xlu0 %v241, 256
    %v244 = vpop.permute.xlu0 %243
    %v245 = vlaneseq
    %v246 = vshrl.u32 %v245, 7
    %v247 = vsub.s32 3, %v246
    %v248 = vrot.slane %v222, %v247
    %250 = vbcast.lane.b32.xlu0 %v248, 256
    %v251 = vpop.permute.xlu0 %250
    %v252 = vlaneseq
    %v253 = vshrl.u32 %v252, 7
    %v254 = vsub.s32 4, %v253
    %v255 = vrot.slane %v222, %v254
    %257 = vbcast.lane.b32.xlu0 %v255, 256
    %v258 = vpop.permute.xlu0 %257
    %v259 = vlaneseq
    %v260 = vshrl.u32 %v259, 7
    %v261 = vsub.s32 5, %v260
    %v262 = vrot.slane %v222, %v261
    %264 = vbcast.lane.b32.xlu0 %v262, 256
    %v265 = vpop.permute.xlu0 %264
    %v266 = vlaneseq
    %v267 = vshrl.u32 %v266, 7
    %v268 = vsub.s32 6, %v267
    %v269 = vrot.slane %v222, %v268
    %271 = vbcast.lane.b32.xlu0 %v269, 256
    %v272 = vpop.permute.xlu0 %271
    %v273 = vlaneseq
    %v274 = vshrl.u32 %v273, 7
    %v275 = vsub.s32 7, %v274
    %v276 = vrot.slane %v222, %v275
    %278 = vbcast.lane.b32.xlu0 %v276, 256
    %v279 = vpop.permute.xlu0 %278
    %v288 = vadd.f32 %v200, %v230
    %v289 = vadd.f32 %v203, %v237
    %v290 = vadd.f32 %v206, %v244
    %v291 = vadd.f32 %v209, %v251
    %v292 = vadd.f32 %v212, %v258
    %v293 = vadd.f32 %v215, %v265
    %v294 = vadd.f32 %v218, %v272
    %v295 = vadd.f32 %v221, %v279
    %304 = vset.pattern.permute.xlu0 0
    %305 = vperm.xlu0 %304, %v288
    %v306 = vpop.permute.xlu0 %305
    %307 = vset.pattern.permute.xlu0 0
    %308 = vperm.xlu0 %307, %v289
    %v309 = vpop.permute.xlu0 %308
    %310 = vset.pattern.permute.xlu0 0
    %311 = vperm.xlu0 %310, %v290
    %v312 = vpop.permute.xlu0 %311
    %313 = vset.pattern.permute.xlu0 0
    %314 = vperm.xlu0 %313, %v291
    %v315 = vpop.permute.xlu0 %314
    %316 = vset.pattern.permute.xlu0 0
    %317 = vperm.xlu0 %316, %v292
    %v318 = vpop.permute.xlu0 %317
    %319 = vset.pattern.permute.xlu0 0
    %320 = vperm.xlu0 %319, %v293
    %v321 = vpop.permute.xlu0 %320
    %322 = vset.pattern.permute.xlu0 0
    %323 = vperm.xlu0 %322, %v294
    %v324 = vpop.permute.xlu0 %323
    %325 = vset.pattern.permute.xlu0 0
    %326 = vperm.xlu0 %325, %v295
    %v327 = vpop.permute.xlu0 %326
    %v328 = vlaneseq
    %v329 = vand.u32 %v328, 127
    %v330 = vlaneseq
    %v331 = vshrl.u32 %v330, 7
    %v332 = vsub.s32 %v329, %v331
    %v333 = vrot.slane %v306, %v332
    %v334 = vlaneseq
    %v335 = vshrl.u32 %v334, 7
    %v336 = vsub.s32 %v329, %v335
    %v337 = vrot.slane %v309, %v336
    %v338 = vlaneseq
    %v339 = vshrl.u32 %v338, 7
    %v340 = vsub.s32 %v329, %v339
    %v341 = vrot.slane %v312, %v340
    %v342 = vlaneseq
    %v343 = vshrl.u32 %v342, 7
    %v344 = vsub.s32 %v329, %v343
    %v345 = vrot.slane %v315, %v344
    %v346 = vlaneseq
    %v347 = vshrl.u32 %v346, 7
    %v348 = vsub.s32 %v329, %v347
    %v349 = vrot.slane %v318, %v348
    %v350 = vlaneseq
    %v351 = vshrl.u32 %v350, 7
    %v352 = vsub.s32 %v329, %v351
    %v353 = vrot.slane %v321, %v352
    %v354 = vlaneseq
    %v355 = vshrl.u32 %v354, 7
    %v356 = vsub.s32 %v329, %v355
    %v357 = vrot.slane %v324, %v356
    %v358 = vlaneseq
    %v359 = vshrl.u32 %v358, 7
    %v360 = vsub.s32 %v329, %v359
    %v361 = vrot.slane %v327, %v360
    %vm362 = vcmask 1041409
    %v363 = vsel %vm362, %v337, %v333
    %vm364 = vcmask 1042434
    %v365 = vsel %vm364, %v341, %v363
    %vm366 = vcmask 1043459
    %v367 = vsel %vm366, %v345, %v365
    %vm368 = vcmask 1044484
    %v369 = vsel %vm368, %v349, %v367
    %vm370 = vcmask 1045509
    %v371 = vsel %vm370, %v353, %v369
    %vm372 = vcmask 1046534
    %v373 = vsel %vm372, %v357, %v371
    %vm374 = vcmask 1047559
    %v375 = vsel %vm374, %v361, %v373
    %vm377 = vcmask 64512
    %v378 = vsel %vm377, %v375, -inf
    %379 = vmax.xlane.f32.xlu0 %v378
    %v380 = vpop.xlane.xlu0 %379
    %v382 = vlaneseq
    %v383 = vshrl.u32 %v382, 7
    %v384 = vsub.s32 0, %v383
    %v385 = vrot.slane %v380, %v384
    %v386 = vlaneseq
    %v387 = vshrl.u32 %v386, 7
    %v388 = vsub.s32 1, %v387
    %v389 = vrot.slane %v380, %v388
    %v390 = vlaneseq
    %v391 = vshrl.u32 %v390, 7
    %v392 = vsub.s32 2, %v391
    %v393 = vrot.slane %v380, %v392
    %v394 = vlaneseq
    %v395 = vshrl.u32 %v394, 7
    %v396 = vsub.s32 3, %v395
    %v397 = vrot.slane %v380, %v396
    %v398 = vlaneseq
    %v399 = vshrl.u32 %v398, 7
    %v400 = vsub.s32 4, %v399
    %v401 = vrot.slane %v380, %v400
    %v402 = vlaneseq
    %v403 = vshrl.u32 %v402, 7
    %v404 = vsub.s32 5, %v403
    %v405 = vrot.slane %v380, %v404
    %v406 = vlaneseq
    %v407 = vshrl.u32 %v406, 7
    %v408 = vsub.s32 6, %v407
    %v409 = vrot.slane %v380, %v408
    %v410 = vlaneseq
    %v411 = vshrl.u32 %v410, 7
    %v412 = vsub.s32 7, %v411
    %v413 = vrot.slane %v380, %v412
    %v422 = vsub.f32 %v288, %v385
    %v423 = vsub.f32 %v289, %v389
    %v424 = vsub.f32 %v290, %v393
    %v425 = vsub.f32 %v291, %v397
    %v426 = vsub.f32 %v292, %v401
    %v427 = vsub.f32 %v293, %v405
    %v428 = vsub.f32 %v294, %v409
    %v429 = vsub.f32 %v295, %v413
    %v430 = vmul.f32 %v422, 1.442695
    %v431 = vpow.pop %v430
    %v432 = vmul.f32 %v423, 1.442695
    %v433 = vpow.pop %v432
    %v434 = vmul.f32 %v424, 1.442695
    %v435 = vpow.pop %v434
    %v436 = vmul.f32 %v425, 1.442695
    %v437 = vpow.pop %v436
    %v438 = vmul.f32 %v426, 1.442695
    %v439 = vpow.pop %v438
    %v440 = vmul.f32 %v427, 1.442695
    %v441 = vpow.pop %v440
    %v442 = vmul.f32 %v428, 1.442695
    %v443 = vpow.pop %v442
    %v444 = vmul.f32 %v429, 1.442695
    %v445 = vpow.pop %v444
    %454 = vset.pattern.permute.xlu0 0
    %455 = vperm.xlu0 %454, %v431
    %v456 = vpop.permute.xlu0 %455
    %457 = vset.pattern.permute.xlu0 0
    %458 = vperm.xlu0 %457, %v433
    %v459 = vpop.permute.xlu0 %458
    %460 = vset.pattern.permute.xlu0 0
    %461 = vperm.xlu0 %460, %v435
    %v462 = vpop.permute.xlu0 %461
    %463 = vset.pattern.permute.xlu0 0
    %464 = vperm.xlu0 %463, %v437
    %v465 = vpop.permute.xlu0 %464
    %466 = vset.pattern.permute.xlu0 0
    %467 = vperm.xlu0 %466, %v439
    %v468 = vpop.permute.xlu0 %467
    %469 = vset.pattern.permute.xlu0 0
    %470 = vperm.xlu0 %469, %v441
    %v471 = vpop.permute.xlu0 %470
    %472 = vset.pattern.permute.xlu0 0
    %473 = vperm.xlu0 %472, %v443
    %v474 = vpop.permute.xlu0 %473
    %475 = vset.pattern.permute.xlu0 0
    %476 = vperm.xlu0 %475, %v445
    %v477 = vpop.permute.xlu0 %476
    %v478 = vlaneseq
    %v479 = vshrl.u32 %v478, 7
    %v480 = vsub.s32 %v329, %v479
    %v481 = vrot.slane %v456, %v480
    %v482 = vlaneseq
    %v483 = vshrl.u32 %v482, 7
    %v484 = vsub.s32 %v329, %v483
    %v485 = vrot.slane %v459, %v484
    %v486 = vlaneseq
    %v487 = vshrl.u32 %v486, 7
    %v488 = vsub.s32 %v329, %v487
    %v489 = vrot.slane %v462, %v488
    %v490 = vlaneseq
    %v491 = vshrl.u32 %v490, 7
    %v492 = vsub.s32 %v329, %v491
    %v493 = vrot.slane %v465, %v492
    %v494 = vlaneseq
    %v495 = vshrl.u32 %v494, 7
    %v496 = vsub.s32 %v329, %v495
    %v497 = vrot.slane %v468, %v496
    %v498 = vlaneseq
    %v499 = vshrl.u32 %v498, 7
    %v500 = vsub.s32 %v329, %v499
    %v501 = vrot.slane %v471, %v500
    %v502 = vlaneseq
    %v503 = vshrl.u32 %v502, 7
    %v504 = vsub.s32 %v329, %v503
    %v505 = vrot.slane %v474, %v504
    %v506 = vlaneseq
    %v507 = vshrl.u32 %v506, 7
    %v508 = vsub.s32 %v329, %v507
    %v509 = vrot.slane %v477, %v508
    %v510 = vsel %vm362, %v485, %v481
    %v511 = vsel %vm364, %v489, %v510
    %v512 = vsel %vm366, %v493, %v511
    %v513 = vsel %vm368, %v497, %v512
    %v514 = vsel %vm370, %v501, %v513
    %v515 = vsel %vm372, %v505, %v514
    %v516 = vsel %vm374, %v509, %v515
    %v518 = vsel %vm377, %v516, 0.0
    %519 = vadd.xlane.f32.xlu0 %v518
    %v520 = vpop.xlane.xlu0 %519
    %v521 = vrcp.pop %v520
    %v523 = vlaneseq
    %v524 = vshrl.u32 %v523, 7
    %v525 = vsub.s32 0, %v524
    %v526 = vrot.slane %v521, %v525
    %v527 = vlaneseq
    %v528 = vshrl.u32 %v527, 7
    %v529 = vsub.s32 1, %v528
    %v530 = vrot.slane %v521, %v529
    %v531 = vlaneseq
    %v532 = vshrl.u32 %v531, 7
    %v533 = vsub.s32 2, %v532
    %v534 = vrot.slane %v521, %v533
    %v535 = vlaneseq
    %v536 = vshrl.u32 %v535, 7
    %v537 = vsub.s32 3, %v536
    %v538 = vrot.slane %v521, %v537
    %v539 = vlaneseq
    %v540 = vshrl.u32 %v539, 7
    %v541 = vsub.s32 4, %v540
    %v542 = vrot.slane %v521, %v541
    %v543 = vlaneseq
    %v544 = vshrl.u32 %v543, 7
    %v545 = vsub.s32 5, %v544
    %v546 = vrot.slane %v521, %v545
    %v547 = vlaneseq
    %v548 = vshrl.u32 %v547, 7
    %v549 = vsub.s32 6, %v548
    %v550 = vrot.slane %v521, %v549
    %v551 = vlaneseq
    %v552 = vshrl.u32 %v551, 7
    %v553 = vsub.s32 7, %v552
    %v554 = vrot.slane %v521, %v553
    %v563 = vmul.f32 %v431, %v526
    %v564 = vmul.f32 %v433, %v530
    %v565 = vmul.f32 %v435, %v534
    %v566 = vmul.f32 %v437, %v538
    %v567 = vmul.f32 %v439, %v542
    %v568 = vmul.f32 %v441, %v546
    %v569 = vmul.f32 %v443, %v550
    %v570 = vmul.f32 %v445, %v554
    %572 = vset.pattern.permute.xlu0 0
    %573 = vperm.xlu0 %572, %v563
    %v574 = vpop.permute.xlu0 %573
    %577 = vset.pattern.permute.xlu0 0
    %578 = vperm.xlu0 %577, %v564
    %v579 = vpop.permute.xlu0 %578
    %582 = vset.pattern.permute.xlu0 0
    %583 = vperm.xlu0 %582, %v565
    %v584 = vpop.permute.xlu0 %583
    %587 = vset.pattern.permute.xlu0 0
    %588 = vperm.xlu0 %587, %v566
    %v589 = vpop.permute.xlu0 %588
    %592 = vset.pattern.permute.xlu0 0
    %593 = vperm.xlu0 %592, %v567
    %v594 = vpop.permute.xlu0 %593
    %597 = vset.pattern.permute.xlu0 0
    %598 = vperm.xlu0 %597, %v568
    %v599 = vpop.permute.xlu0 %598
    %602 = vset.pattern.permute.xlu0 0
    %603 = vperm.xlu0 %602, %v569
    %v604 = vpop.permute.xlu0 %603
    %607 = vset.pattern.permute.xlu0 0
    %608 = vperm.xlu0 %607, %v570
    %v609 = vpop.permute.xlu0 %608
    %v611 = vmul.f32 %v574, %v32
    %v612 = vmul.f32 %v579, %v33
    %v613 = vmul.f32 %v584, %v34
    %v614 = vmul.f32 %v589, %v35
    %v615 = vmul.f32 %v594, %v36
    %v616 = vmul.f32 %v599, %v37
    %v617 = vmul.f32 %v604, %v38
    %v618 = vmul.f32 %v609, %v39
    %v619 = vsel %vm45, %v611, 0.0
    %v620 = vrot.slane %v619, 4
    %v621 = vadd.f32 %v619, %v620
    %v622 = vrot.slane %v621, 2
    %v623 = vadd.f32 %v621, %v622
    %v624 = vrot.slane %v623, 1
    %v625 = vadd.f32 %v623, %v624
    %v626 = vsel %vm45, %v612, 0.0
    %v627 = vrot.slane %v626, 4
    %v628 = vadd.f32 %v626, %v627
    %v629 = vrot.slane %v628, 2
    %v630 = vadd.f32 %v628, %v629
    %v631 = vrot.slane %v630, 1
    %v632 = vadd.f32 %v630, %v631
    %v633 = vsel %vm45, %v613, 0.0
    %v634 = vrot.slane %v633, 4
    %v635 = vadd.f32 %v633, %v634
    %v636 = vrot.slane %v635, 2
    %v637 = vadd.f32 %v635, %v636
    %v638 = vrot.slane %v637, 1
    %v639 = vadd.f32 %v637, %v638
    %v640 = vsel %vm45, %v614, 0.0
    %v641 = vrot.slane %v640, 4
    %v642 = vadd.f32 %v640, %v641
    %v643 = vrot.slane %v642, 2
    %v644 = vadd.f32 %v642, %v643
    %v645 = vrot.slane %v644, 1
    %v646 = vadd.f32 %v644, %v645
    %v647 = vsel %vm45, %v615, 0.0
    %v648 = vrot.slane %v647, 4
    %v649 = vadd.f32 %v647, %v648
    %v650 = vrot.slane %v649, 2
    %v651 = vadd.f32 %v649, %v650
    %v652 = vrot.slane %v651, 1
    %v653 = vadd.f32 %v651, %v652
    %v654 = vsel %vm45, %v616, 0.0
    %v655 = vrot.slane %v654, 4
    %v656 = vadd.f32 %v654, %v655
    %v657 = vrot.slane %v656, 2
    %v658 = vadd.f32 %v656, %v657
    %v659 = vrot.slane %v658, 1
    %v660 = vadd.f32 %v658, %v659
    %v661 = vsel %vm45, %v617, 0.0
    %v662 = vrot.slane %v661, 4
    %v663 = vadd.f32 %v661, %v662
    %v664 = vrot.slane %v663, 2
    %v665 = vadd.f32 %v663, %v664
    %v666 = vrot.slane %v665, 1
    %v667 = vadd.f32 %v665, %v666
    %v668 = vsel %vm45, %v618, 0.0
    %v669 = vrot.slane %v668, 4
    %v670 = vadd.f32 %v668, %v669
    %v671 = vrot.slane %v670, 2
    %v672 = vadd.f32 %v670, %v671
    %v673 = vrot.slane %v672, 1
    %v674 = vadd.f32 %v672, %v673
    %v683 = vsel %vm362, %v632, %v625
    %v684 = vsel %vm364, %v639, %v683
    %v685 = vsel %vm366, %v646, %v684
    %v686 = vsel %vm368, %v653, %v685
    %v687 = vsel %vm370, %v660, %v686
    %v688 = vsel %vm372, %v667, %v687
    %v689 = vsel %vm374, %v674, %v688
    %691 = vst.msk [vmem:[#allocation5] sm:$0xff] %vm45, %v689
    // Predicated region
    $region22: #{tpu_custom_call.1} parent=1 // pred_check
      _
    $region23: #{tpu_custom_call.1} parent=1 // pred_check_branch
      %693 = sbr.rel (0) target = $region25
    $region24: #{tpu_custom_call.1} parent=1 // pred_region
      %s695 = ssub.s32 128, 128
      %696 = vsyncadd [#allocation4], %s695
      %s698 = sshll.u32 [#allocation5], 4
      %s699 = int_to_ptr.vmem [resolvable:$true] %s698
      %701 = dma.vmem_to_hbm [thread:$0]  %s699, 128, %s4, [#allocation4]
    $region25: #{tpu_custom_call.1} parent=1 // pred_fallthru
      _
    // Predicated region
    $region26: #{tpu_custom_call.1} parent=1 // pred_check
      _
    $region27: #{tpu_custom_call.1} parent=1 // pred_check_branch
      %703 = sbr.rel (0) target = $region29
    $region28: #{tpu_custom_call.1} parent=1 // pred_region
      %704 = dma.done [#allocation4], 128
    $region29: #{tpu_custom_call.1} parent=1 // pred_fallthru
      _
    %705 = vsyncpa [#allocation3], 1
    %706 = vsyncpa [#allocation4], 1

</llo_original>
